<compile_context>
chip_gen: v6e
topology: v6e:2x2x1
jax: 0.10.0
libtpu: 0.0.40
codegen_flags: <defaults>
</compile_context>

<pallas_src>
import functools

import jax
import jax.numpy as jnp
from jax.experimental import pallas as pl
from jax.experimental.pallas import tpu as pltpu

_SUBLANE = 8
_LANE = 128
# Per-input tile budget (~2 MiB of f32): 3 inputs x 2 pipeline buffers stays
# ~12 MiB, inside v5e's 16 MiB default scoped-VMEM limit (and far inside
# v6e/v7x's 32 MiB default / v7x's 64 MiB physical VMEM).
_TILE_BUDGET_ELEMS = (2 * 1024 * 1024) // 4


def _triplet_kernel(a_ref, p_ref, n_ref, out_ref, acc_ref, *,
                    margin, true_d, td, multi_d):
    a = a_ref[...].astype(jnp.float32)
    p = p_ref[...].astype(jnp.float32)
    n = n_ref[...].astype(jnp.float32)

    dp = a - p
    dn = a - n
    # Fused: a single reduction tree instead of two (dp^2 and dn^2 summed
    # separately).
    diff = dp * dp - dn * dn  # (TB, TD), f32

    if not multi_d:
        # Single feature tile: TD == D exactly, so no tail mask and no
        # cross-step accumulator are needed.  Do the cross-lane reduce,
        # margin and relu in one shot.
        out_ref[...] = jnp.maximum(
            jnp.sum(diff, axis=1, keepdims=True) + margin, 0.0)
        return

    d = pl.program_id(1)

    if true_d % td != 0:
        # Ragged final D tile: zero out lanes past the true feature dim so
        # OOB (undefined) input data never enters the reduction.
        lane = jax.lax.broadcasted_iota(jnp.int32, diff.shape, 1)
        diff = jnp.where(d * td + lane < true_d, diff, 0.0)

    @pl.when(d == 0)
    def _():
        acc_ref[...] = jnp.zeros_like(acc_ref)

    # Lane-partial accumulation: static 128-lane slices added on the VPU each
    # step; the single cross-lane (XLU) reduce is deferred to the last step.
    partial = diff[:, 0:_LANE]
    for j in range(1, td // _LANE):
        partial = partial + diff[:, j * _LANE:(j + 1) * _LANE]
    acc_ref[...] += partial

    @pl.when(d == pl.num_programs(1) - 1)
    def _():
        out_ref[...] = jnp.maximum(
            jnp.sum(acc_ref[...], axis=1, keepdims=True) + margin, 0.0)


def _round_up(x, m):
    return ((x + m - 1) // m) * m


def triplet_loss(anchor, positive, negative, margin, size_average=True):
    """Pallas TripletLoss. anchor/positive/negative: (B, D), f32 or bf16."""
    assert anchor.shape == positive.shape == negative.shape
    assert anchor.ndim == 2
    B, D = anchor.shape

    # ---- Feature tiling ---------------------------------------------------
    if D <= 2048:
        TD = D            # full-extent last dim is always a legal block
        multi_d = False
    else:
        TD = 512          # 128-lane multiple, big enough to amortize per-step
        multi_d = True    # overhead; ragged final tile masked in-kernel.
    n_d = pl.cdiv(D, TD)

    # ---- Batch tiling (VMEM-budget driven) ----------------------------------
    tb_budget = max(_SUBLANE,
                    (_TILE_BUDGET_ELEMS // TD) // _SUBLANE * _SUBLANE)
    TB = min(tb_budget, _round_up(B, _SUBLANE))
    # Prefer >=2 batch tiles so the "parallel" batch axis can shard across
    # both TensorCores on v7x (negligible extra per-step overhead elsewhere).
    if pl.cdiv(B, TB) < 2 and TB >= 2 * _SUBLANE:
        TB = _round_up(TB // 2, _SUBLANE)
    n_b = pl.cdiv(B, TB)

    kernel = functools.partial(
        _triplet_kernel, margin=float(margin), true_d=D, td=TD,
        multi_d=multi_d)

    per_row = pl.pallas_call(
        kernel,
        out_shape=jax.ShapeDtypeStruct((B, 1), jnp.float32),
        grid_spec=pltpu.PrefetchScalarGridSpec(
            num_scalar_prefetch=0,
            grid=(n_b, n_d),                       # reduction axis (D) last
            in_specs=[
                pl.BlockSpec((TB, TD), lambda b, d: (b, d)),
                pl.BlockSpec((TB, TD), lambda b, d: (b, d)),
                pl.BlockSpec((TB, TD), lambda b, d: (b, d)),
            ],
            out_specs=pl.BlockSpec((TB, 1), lambda b, d: (b, 0)),
            # Lane-partial accumulator (unused in the single-D-tile case).
            scratch_shapes=[pltpu.VMEM((TB, _LANE), jnp.float32)],
        ),
        compiler_params=pltpu.CompilerParams(
            # Batch tiles are independent (both TCs on v7x); feature axis is
            # the serial reduction axis.
            dimension_semantics=("parallel", "arbitrary"),
        ),
    )(anchor, positive, negative)

    losses = per_row[:, 0]
    return jnp.mean(losses) if size_average else jnp.sum(losses)


def triplet_loss_ref(anchor, positive, negative, margin, size_average=True):
    """Pure-JAX reference (mirrors the PyTorch forward)."""
    a = anchor.astype(jnp.float32)
    p = positive.astype(jnp.float32)
    n = negative.astype(jnp.float32)
    dp = jnp.sum((a - p) ** 2, axis=1)
    dn = jnp.sum((a - n) ** 2, axis=1)
    losses = jax.nn.relu(dp - dn + margin)
    return jnp.mean(losses) if size_average else jnp.sum(losses)


if __name__ == "__main__":
    key = jax.random.PRNGKey(0)
    margin = 1.0
    ks = jax.random.split(key, 9)

    # --- Primary small test (module-typical embedding shapes) ---------------
    B, D = 8, 32
    anchor = jax.random.normal(ks[0], (B, D), dtype=jnp.float32)
    positive = jax.random.normal(ks[1], (B, D), dtype=jnp.float32)
    negative = jax.random.normal(ks[2], (B, D), dtype=jnp.float32)

    out = jax.block_until_ready(
        triplet_loss(anchor, positive, negative, margin, size_average=True))
    ref = triplet_loss_ref(anchor, positive, negative, margin, size_average=True)
    assert jnp.allclose(out, ref, rtol=1e-5, atol=1e-5), (out, ref)

    out_sum = jax.block_until_ready(
        triplet_loss(anchor, positive, negative, margin, size_average=False))
    ref_sum = triplet_loss_ref(anchor, positive, negative, margin,
                               size_average=False)
    assert jnp.allclose(out_sum, ref_sum, rtol=1e-5, atol=1e-5), (out_sum, ref_sum)

    # --- Unaligned batch + full-extent D tile, 2 batch tiles, no host pad ---
    B2, D2 = 50, 600
    a2 = jax.random.normal(ks[3], (B2, D2), dtype=jnp.float32)
    p2 = jax.random.normal(ks[4], (B2, D2), dtype=jnp.float32)
    n2 = jax.random.normal(ks[5], (B2, D2), dtype=jnp.float32)
    out2 = jax.block_until_ready(triplet_loss(a2, p2, n2, margin))
    ref2 = triplet_loss_ref(a2, p2, n2, margin)
    assert jnp.allclose(out2, ref2, rtol=1e-4, atol=1e-4), (out2, ref2)

    # --- D-axis tiling path (D > 2048): ragged last D tile + accumulator ----
    B3, D3 = 24, 2600
    a3 = jax.random.normal(ks[6], (B3, D3), dtype=jnp.float32)
    p3 = jax.random.normal(ks[7], (B3, D3), dtype=jnp.float32)
    n3 = jax.random.normal(ks[8], (B3, D3), dtype=jnp.float32)
    out3 = jax.block_until_ready(triplet_loss(a3, p3, n3, margin))
    ref3 = triplet_loss_ref(a3, p3, n3, margin)
    assert jnp.allclose(out3, ref3, rtol=1e-3, atol=1e-3), (out3, ref3)

    # --- bf16 inputs (halved HBM traffic path) -------------------------------
    out_bf = jax.block_until_ready(
        triplet_loss(anchor.astype(jnp.bfloat16), positive.astype(jnp.bfloat16),
                     negative.astype(jnp.bfloat16), margin))
    ref_bf = triplet_loss_ref(anchor.astype(jnp.bfloat16),
                              positive.astype(jnp.bfloat16),
                              negative.astype(jnp.bfloat16), margin)
    assert jnp.allclose(out_bf, ref_bf, rtol=2e-2, atol=2e-2), (out_bf, ref_bf)

    print("KERNEL_OK")
</pallas_src>

<mosaic_0001>
module attributes {stable_mosaic.version = 11 : i64} {
  func.func @_triplet_kernel(%arg0: i32, %arg1: i32, %arg2: memref<8x32xf32, #tpu.memory_space<vmem>>, %arg3: memref<8x32xf32, #tpu.memory_space<vmem>>, %arg4: memref<8x32xf32, #tpu.memory_space<vmem>>, %arg5: memref<8x1xf32, #tpu.memory_space<vmem>>, %arg6: memref<8x128xf32, #tpu.memory_space<vmem>>) attributes {dimension_semantics = [#tpu.dimension_semantics<parallel>, #tpu.dimension_semantics<arbitrary>], iteration_bounds = array<i64: 1, 1>, scalar_prefetch = 0 : i64, scratch_operands = 1 : i64, tpu.core_type = #tpu.core_type<tc>, window_params = [{transform_indices = @transform_0, window_bounds = array<i64: 8, 32>}, {transform_indices = @transform_1, window_bounds = array<i64: 8, 32>}, {transform_indices = @transform_2, window_bounds = array<i64: 8, 32>}, {transform_indices = @transform_3, window_bounds = array<i64: 8, 1>}]} {
    %c0 = arith.constant 0 : index
    %c0_0 = arith.constant 0 : index
    %0 = vector.load %arg2[%c0, %c0_0] : memref<8x32xf32, #tpu.memory_space<vmem>>, vector<8x32xf32>
    %c0_1 = arith.constant 0 : index
    %c0_2 = arith.constant 0 : index
    %1 = vector.load %arg3[%c0_1, %c0_2] : memref<8x32xf32, #tpu.memory_space<vmem>>, vector<8x32xf32>
    %c0_3 = arith.constant 0 : index
    %c0_4 = arith.constant 0 : index
    %2 = vector.load %arg4[%c0_3, %c0_4] : memref<8x32xf32, #tpu.memory_space<vmem>>, vector<8x32xf32>
    %3 = arith.subf %0, %1 : vector<8x32xf32>
    %4 = arith.subf %0, %2 : vector<8x32xf32>
    %5 = arith.mulf %3, %3 : vector<8x32xf32>
    %6 = arith.mulf %4, %4 : vector<8x32xf32>
    %7 = arith.subf %5, %6 : vector<8x32xf32>
    %cst = arith.constant dense<0.000000e+00> : vector<8xf32>
    %8 = vector.multi_reduction <add>, %7, %cst [1] : vector<8x32xf32> to vector<8xf32>
    %9 = vector.shape_cast %8 : vector<8xf32> to vector<8x1xf32>
    %cst_5 = arith.constant 1.000000e+00 : f32
    %10 = vector.broadcast %cst_5 : f32 to vector<8x1xf32>
    %11 = arith.addf %9, %10 : vector<8x1xf32>
    %cst_6 = arith.constant 0.000000e+00 : f32
    %12 = vector.broadcast %cst_6 : f32 to vector<8x1xf32>
    %13 = arith.maximumf %11, %12 : vector<8x1xf32>
    %c0_7 = arith.constant 0 : index
    %c0_8 = arith.constant 0 : index
    %14 = vector.load %arg5[%c0_7, %c0_8] : memref<8x1xf32, #tpu.memory_space<vmem>>, vector<8x1xf32>
    tpu.vector_store %arg5[%c0_7, %c0_8], %13 {strides = array<i32>} : memref<8x1xf32, #tpu.memory_space<vmem>>, vector<8x1xf32>,
    return
  }
  func.func @transform_0(%arg0: i32, %arg1: i32) -> (i32, i32) {
    %c0_i32 = arith.constant 0 : i32
    return %arg0, %arg1 : i32, i32
  }
  func.func @transform_1(%arg0: i32, %arg1: i32) -> (i32, i32) {
    %c0_i32 = arith.constant 0 : i32
    return %arg0, %arg1 : i32, i32
  }
  func.func @transform_2(%arg0: i32, %arg1: i32) -> (i32, i32) {
    %c0_i32 = arith.constant 0 : i32
    return %arg0, %arg1 : i32, i32
  }
  func.func @transform_3(%arg0: i32, %arg1: i32) -> (i32, i32) {
    %c0_i32 = arith.constant 0 : i32
    %c0_i32_0 = arith.constant 0 : i32
    return %arg0, %c0_i32 : i32, i32
  }
}

</mosaic_0001>

<llo_original>
// kernel: tpu_custom_call.1
$region0: #{tpu_custom_call.1}
  #allocation0 [shape = 'u32[]', space=smem, size = 0x4, offset = 0x4, fixed_abs, tag = 'smem constant byte address 0x4 - core index']
  #allocation1 [shape = 'u32[144,128]{1,0:T(1,128)}', space=vmem, size = 0x12000, scoped, tag = 'internal scratch']
  #allocation2 [shape = 'f32[8,128]{1,0:T(8,128)}', space=vmem, size = 0x1000, scoped, tag = 'scratch operand']
  %s0 = inlined_call_operand.hbm [shape: f32[8,32], index: 0, kind: input, shape index: {}]
  %s1 = inlined_call_operand.hbm [shape: f32[8,32], index: 1, kind: input, shape index: {}]
  %s2 = inlined_call_operand.hbm [shape: f32[8,32], index: 2, kind: input, shape index: {}]
  %s3 = inlined_call_operand.vmem [shape: f32[8,1], index: 3, kind: output, shape index: {}]
  %s4 = sld [smem:[#allocation0]]
  $region34: #{tpu_custom_call.1} parent=0
    _
  %s6 = ssub.s32 1, %s4
  %s7 = scalar_select 0, %s6, %s4
  $region1: #{tpu_custom_call.1} parent=0
    #allocation3 [shape = 'u8[4096]{0}', space=vmem, size = 0x1000, scoped, tag = 'input window, operand 0, single buffered']
    #allocation4 [shape = 's32[1]{0}', space=sflag, size = 0x4, scoped, tag = 'scoped memory for tpu_custom_call.1']
    #allocation5 [shape = 'u8[4096]{0}', space=vmem, size = 0x1000, scoped, tag = 'input window, operand 1, single buffered']
    #allocation6 [shape = 's32[1]{0}', space=sflag, size = 0x4, scoped, tag = 'scoped memory for tpu_custom_call.1']
    #allocation7 [shape = 'u8[4096]{0}', space=vmem, size = 0x1000, scoped, tag = 'input window, operand 2, single buffered']
    %8 = vsyncpa [#allocation4], 0
    %9 = vsyncpa [#allocation6], 0
    // Predicated region
    $region2: #{tpu_custom_call.1} parent=1 // pred_check
      _
    $region3: #{tpu_custom_call.1} parent=1 // pred_check_branch
      %11 = sbr.rel (0) target = $region5
    $region4: #{tpu_custom_call.1} parent=1 // pred_region
      %s13 = ssub.s32 128, 128
      %14 = vsyncadd [#allocation4], %s13
      %s16 = sshll.u32 [#allocation3], 4
      %s17 = int_to_ptr.vmem [resolvable:$true] %s16
      %19 = dma.hbm_to_vmem [thread:$0]  %s0, 128, %s17, [#allocation4]
    $region5: #{tpu_custom_call.1} parent=1 // pred_fallthru
      _
    // Predicated region
    $region6: #{tpu_custom_call.1} parent=1 // pred_check
      _
    $region7: #{tpu_custom_call.1} parent=1 // pred_check_branch
      %21 = sbr.rel (0) target = $region9
    $region8: #{tpu_custom_call.1} parent=1 // pred_region
      %s23 = ssub.s32 128, 128
      %24 = vsyncadd [#allocation6], %s23
      %s26 = sshll.u32 [#allocation5], 4
      %s27 = int_to_ptr.vmem [resolvable:$true] %s26
      %29 = dma.hbm_to_vmem [thread:$0]  %s1, 128, %s27, [#allocation6]
    $region9: #{tpu_custom_call.1} parent=1 // pred_fallthru
      _
    // Predicated region
    $region10: #{tpu_custom_call.1} parent=1 // pred_check
      _
    $region11: #{tpu_custom_call.1} parent=1 // pred_check_branch
      %31 = sbr.rel (0) target = $region13
    $region12: #{tpu_custom_call.1} parent=1 // pred_region
      %s33 = ssub.s32 128, 128
      %34 = vsyncadd [#allocation6], %s33
      %s36 = sshll.u32 [#allocation7], 4
      %s37 = int_to_ptr.vmem [resolvable:$true] %s36
      %39 = dma.hbm_to_vmem [thread:$0]  %s2, 128, %s37, [#allocation6]
    $region13: #{tpu_custom_call.1} parent=1 // pred_fallthru
      _
    // Predicated region
    $region14: #{tpu_custom_call.1} parent=1 // pred_check
      _
    $region15: #{tpu_custom_call.1} parent=1 // pred_check_branch
      %41 = sbr.rel (0) target = $region17
    $region16: #{tpu_custom_call.1} parent=1 // pred_region
      %42 = dma.done [#allocation4], 128
    $region17: #{tpu_custom_call.1} parent=1 // pred_fallthru
      _
    // Predicated region
    $region18: #{tpu_custom_call.1} parent=1 // pred_check
      _
    $region19: #{tpu_custom_call.1} parent=1 // pred_check_branch
      %44 = sbr.rel (0) target = $region21
    $region20: #{tpu_custom_call.1} parent=1 // pred_region
      %45 = dma.done [#allocation6], 128
    $region21: #{tpu_custom_call.1} parent=1 // pred_fallthru
      _
    // Predicated region
    $region22: #{tpu_custom_call.1} parent=1 // pred_check
      _
    $region23: #{tpu_custom_call.1} parent=1 // pred_check_branch
      %47 = sbr.rel (0) target = $region25
    $region24: #{tpu_custom_call.1} parent=1 // pred_region
      %48 = dma.done [#allocation6], 128
    $region25: #{tpu_custom_call.1} parent=1 // pred_fallthru
      _
    %v49 = vld [vmem:[#allocation3] sm:$0xff]
    %v50 = vld [vmem:[#allocation5] sm:$0xff]
    %v51 = vld [vmem:[#allocation7] sm:$0xff]
    %v52 = vsub.f32 %v49, %v50
    %v53 = vsub.f32 %v49, %v51
    %v54 = vmul.f32 %v52, %v52
    %v55 = vmul.f32 %v53, %v53
    %v56 = vsub.f32 %v54, %v55
    %vm57 = vcmask 261120
    %v58 = vsel %vm57, %v56, 0.0
    %59 = vadd.xlane.f32.xlu0 %v58
    %v60 = vpop.xlane.xlu0 %59
    %v61 = vadd.f32 %v60, 1.0
    %v62 = vmax.f32 %v61, 0.0
    %vm63 = vcmask 7168
    %64 = vst.msk [vmem:[%s3] sm:$0xff] %vm63, %v62
    // Predicated region
    $region26: #{tpu_custom_call.1} parent=1 // pred_check
      _
    $region27: #{tpu_custom_call.1} parent=1 // pred_check_branch
      %66 = sbr.rel (0) target = $region29
    $region28: #{tpu_custom_call.1} parent=1 // pred_region
      _
    $region29: #{tpu_custom_call.1} parent=1 // pred_fallthru
      _
    // Predicated region
    $region30: #{tpu_custom_call.1} parent=1 // pred_check
      _
    $region31: #{tpu_custom_call.1} parent=1 // pred_check_branch
      %68 = sbr.rel (0) target = $region33
    $region32: #{tpu_custom_call.1} parent=1 // pred_region
      _
    $region33: #{tpu_custom_call.1} parent=1 // pred_fallthru
      _
    %69 = vsyncpa [#allocation4], 1
    %70 = vsyncpa [#allocation6], 1

</llo_original>
